<compile_context>
chip_gen: v7x
topology: tpu7x:2x2x1
jax: 0.10.0
libtpu: 0.0.40
codegen_flags: <defaults>
</compile_context>

<pallas_src>
import functools
import math

import jax
import jax.numpy as jnp
from jax.experimental import pallas as pl
from jax.experimental.pallas import tpu as pltpu

_MIB = 1024 * 1024
# Fused path keeps ~4x the x-slab live in VMEM (double-buffered in + out).
_FUSED_SLAB_BUDGET_BYTES = 24 * _MIB
_TWO_PASS_MAX_TILE = 2048  # lanes per spatial tile in the fallback path


def _round_up(x, m):
    return (x + m - 1) // m * m


# -----------------------------------------------------------------------------
# Fused single-pass kernel
# -----------------------------------------------------------------------------
def _se_fused_kernel(x_ref, w1t_ref, b1_ref, w2_ref, b2_ref, o_ref, *, inv_hw):
    x = x_ref[...]                                              # (TB, C, HWp)
    xf = x if x.dtype == jnp.float32 else x.astype(jnp.float32)

    # --- squeeze: global average pool (zero padding adds nothing to the sum) ---
    pooled = jnp.sum(xf, axis=-1, keepdims=True) * inv_hw       # (TB, C, 1)

    # --- excitation on VPU/XLU (no MXU matvec) ---
    # h[b, j] = relu(sum_c pooled[b, c] * w1[j, c] + b1[j])
    h = jnp.sum(pooled * w1t_ref[...][None], axis=1, keepdims=True)   # (TB, 1, Cr)
    h = jnp.maximum(h + b1_ref[...][None], 0.0)
    # s[b, c] = sigmoid(sum_j h[b, j] * w2[c, j] + b2[c])
    s = jnp.sum(h * w2_ref[...][None], axis=2, keepdims=True)         # (TB, C, 1)
    s = jax.nn.sigmoid(s + b2_ref[...][None])

    # --- scale: keep the dominant multiply in the input dtype ---
    o_ref[...] = x * s.astype(x.dtype)


def _se_fused(x_flat, w1, b1, w2, b2, hw_true, tb):
    B, C, HWp = x_flat.shape
    Cr = w1.shape[0]
    itemsize = jnp.dtype(x_flat.dtype).itemsize
    need = 4 * tb * C * HWp * itemsize + 2 * C * Cr * 4
    vmem_limit = int(min(48 * _MIB, max(16 * _MIB, need + 4 * _MIB)))

    kernel = functools.partial(_se_fused_kernel, inv_hw=1.0 / hw_true)
    return pl.pallas_call(
        kernel,
        out_shape=jax.ShapeDtypeStruct((B, C, HWp), x_flat.dtype),
        grid_spec=pltpu.PrefetchScalarGridSpec(
            num_scalar_prefetch=0,
            grid=(B // tb,),
            in_specs=[
                pl.BlockSpec((tb, C, HWp), lambda i: (i, 0, 0)),   # x
                pl.BlockSpec((C, Cr), lambda i: (0, 0)),           # w1^T
                pl.BlockSpec((1, Cr), lambda i: (0, 0)),           # b1
                pl.BlockSpec((C, Cr), lambda i: (0, 0)),           # w2
                pl.BlockSpec((C, 1), lambda i: (0, 0)),            # b2
            ],
            out_specs=pl.BlockSpec((tb, C, HWp), lambda i: (i, 0, 0)),
        ),
        input_output_aliases={0: 0},
        compiler_params=pltpu.CompilerParams(
            dimension_semantics=("parallel",),
            vmem_limit_bytes=vmem_limit),
    )(x_flat, jnp.transpose(w1), b1.reshape(1, Cr), w2, b2.reshape(C, 1))


# -----------------------------------------------------------------------------
# Two-pass fallback (large C*HW: safe small tiles, full pipelining)
# -----------------------------------------------------------------------------
def _pool_sum_kernel(x_ref, sum_ref):
    @pl.when(pl.program_id(1) == 0)
    def _():
        sum_ref[...] = jnp.zeros_like(sum_ref)

    x = x_ref[...]                                              # (1, C, T)
    xf = x if x.dtype == jnp.float32 else x.astype(jnp.float32)
    sum_ref[...] += jnp.sum(xf, axis=-1, keepdims=True)         # (1, C, 1)


def _scale_kernel(x_ref, s_ref, o_ref):
    x = x_ref[...]                                              # (1, C, T)
    o_ref[...] = x * s_ref[...].astype(x.dtype)                 # s: (1, C, 1)


def _se_two_pass(x_flat, w1, b1, w2, b2, hw_true, tile):
    B, C, HWp = x_flat.shape
    n_tiles = HWp // tile
    itemsize = jnp.dtype(x_flat.dtype).itemsize
    vmem1 = int(min(48 * _MIB, max(16 * _MIB, 2 * C * tile * itemsize + 4 * _MIB)))
    vmem2 = int(min(48 * _MIB, max(16 * _MIB, 4 * C * tile * itemsize + 4 * _MIB)))

    # Pass 1: channel sums, reduced across spatial tiles.
    sums = pl.pallas_call(
        _pool_sum_kernel,
        out_shape=jax.ShapeDtypeStruct((B, C, 1), jnp.float32),
        grid_spec=pltpu.PrefetchScalarGridSpec(
            num_scalar_prefetch=0,
            grid=(B, n_tiles),
            in_specs=[pl.BlockSpec((1, C, tile), lambda b, t: (b, 0, t))],
            out_specs=pl.BlockSpec((1, C, 1), lambda b, t: (b, 0, 0)),
        ),
        compiler_params=pltpu.CompilerParams(
            dimension_semantics=("parallel", "arbitrary"),
            vmem_limit_bytes=vmem1),
    )(x_flat)

    # Excitation for all B at once: two tiny dense matmuls in plain JAX/XLA.
    pooled = sums[..., 0] * (1.0 / hw_true)                      # (B, C) f32
    h = jnp.maximum(pooled @ w1.astype(jnp.float32).T + b1, 0.0)
    s = jax.nn.sigmoid(h @ w2.astype(jnp.float32).T + b2)        # (B, C)
    s = s.reshape(B, C, 1)

    # Pass 2: lane-dense scale, fully parallel grid.
    return pl.pallas_call(
        _scale_kernel,
        out_shape=jax.ShapeDtypeStruct((B, C, HWp), x_flat.dtype),
        grid_spec=pltpu.PrefetchScalarGridSpec(
            num_scalar_prefetch=0,
            grid=(B, n_tiles),
            in_specs=[pl.BlockSpec((1, C, tile), lambda b, t: (b, 0, t)),
                      pl.BlockSpec((1, C, 1), lambda b, t: (b, 0, 0))],
            out_specs=pl.BlockSpec((1, C, tile), lambda b, t: (b, 0, t)),
        ),
        input_output_aliases={0: 0},
        compiler_params=pltpu.CompilerParams(
            dimension_semantics=("parallel", "parallel"),
            vmem_limit_bytes=vmem2),
    )(x_flat, s)


# -----------------------------------------------------------------------------
# Public wrapper
# -----------------------------------------------------------------------------
def _se_block_impl(x, w1, b1, w2, b2, force_two_pass=False):
    """x: [B, C, H, W] (NCHW, matching the PyTorch module)."""
    B, C, H, W = x.shape
    HW = H * W
    itemsize = jnp.dtype(x.dtype).itemsize

    slab_1 = C * _round_up(HW, 128) * itemsize       # one-batch fused slab
    use_fused = (not force_two_pass) and (4 * slab_1 <= _FUSED_SLAB_BUDGET_BYTES)

    if use_fused:
        HWp = _round_up(HW, 128)
        tb = 1
        for cand in range(1, B + 1):   # largest batch tile within the VMEM budget
            if B % cand == 0 and 4 * cand * C * HWp * itemsize <= _FUSED_SLAB_BUDGET_BYTES:
                tb = cand
    else:
        hw128 = _round_up(HW, 128)
        n_tiles = max(1, math.ceil(hw128 / _TWO_PASS_MAX_TILE))
        tile = _round_up(math.ceil(hw128 / n_tiles), 128)
        HWp = tile * n_tiles

    x_flat = x.reshape(B, C, HW)
    if HWp != HW:
        # zero-pad spatial axis to a multiple of 128 -> unmasked lane-dense stores
        x_flat = jnp.pad(x_flat, ((0, 0), (0, 0), (0, HWp - HW)))

    if use_fused:
        out = _se_fused(x_flat, w1, b1, w2, b2, HW, tb)
    else:
        out = _se_two_pass(x_flat, w1, b1, w2, b2, HW, tile)

    if HWp != HW:
        out = out[..., :HW]
    return out.reshape(B, C, H, W)


se_block = jax.jit(_se_block_impl, static_argnames=("force_two_pass",))


def se_block_ref(x, w1, b1, w2, b2):
    """Pure-JAX reference matching the PyTorch semantics."""
    pooled = jnp.mean(x, axis=(2, 3))                 # [B, C]
    h = jnp.maximum(pooled @ w1.T + b1, 0.0)          # [B, Cr]
    s = jax.nn.sigmoid(h @ w2.T + b2)                 # [B, C]
    return x * s[:, :, None, None]


if __name__ == "__main__":
    B, C = 2, 8
    reduction = 4
    Cr = C // reduction

    key = jax.random.PRNGKey(0)
    kx, k1, k2, k3, k4, kx2, kx3 = jax.random.split(key, 7)

    # Conv2d(C, Cr, 1): weight [Cr, C], bias [Cr]; Conv2d(Cr, C, 1): [C, Cr], [C]
    w1 = jax.random.normal(k1, (Cr, C), dtype=jnp.float32) * 0.2
    b1 = jax.random.normal(k2, (Cr,), dtype=jnp.float32) * 0.1
    w2 = jax.random.normal(k3, (C, Cr), dtype=jnp.float32) * 0.2
    b2 = jax.random.normal(k4, (C,), dtype=jnp.float32) * 0.1

    # 1) fused path, HW already a multiple of 128
    x = jax.random.normal(kx, (B, C, 16, 16), dtype=jnp.float32)
    y = jax.block_until_ready(se_block(x, w1, b1, w2, b2))
    assert jnp.allclose(y, se_block_ref(x, w1, b1, w2, b2), atol=1e-5, rtol=1e-5)

    # 2) fused path with spatial padding (HW = 144 -> 256)
    x2 = jax.random.normal(kx2, (B, C, 12, 12), dtype=jnp.float32)
    y2 = jax.block_until_ready(se_block(x2, w1, b1, w2, b2))
    assert jnp.allclose(y2, se_block_ref(x2, w1, b1, w2, b2), atol=1e-5, rtol=1e-5)

    # 3) two-pass fallback path (forced), multiple spatial tiles
    x3 = jax.random.normal(kx3, (B, C, 48, 48), dtype=jnp.float32)
    y3 = jax.block_until_ready(se_block(x3, w1, b1, w2, b2, force_two_pass=True))
    assert jnp.allclose(y3, se_block_ref(x3, w1, b1, w2, b2), atol=1e-5, rtol=1e-5)

    print("KERNEL_OK")
</pallas_src>

<mosaic_0001>
module attributes {stable_mosaic.version = 11 : i64} {
  func.func @_se_fused_kernel(%arg0: i32, %arg1: memref<2x8x256xf32, #tpu.memory_space<vmem>>, %arg2: memref<8x2xf32, #tpu.memory_space<vmem>>, %arg3: memref<1x2xf32, #tpu.memory_space<vmem>>, %arg4: memref<8x2xf32, #tpu.memory_space<vmem>>, %arg5: memref<8x1xf32, #tpu.memory_space<vmem>>, %arg6: memref<2x8x256xf32, #tpu.memory_space<vmem>>) attributes {dimension_semantics = [#tpu.dimension_semantics<parallel>], iteration_bounds = array<i64: 1>, scalar_prefetch = 0 : i64, scratch_operands = 0 : i64, tpu.core_type = #tpu.core_type<tc>, window_params = [{transform_indices = @transform_0, window_bounds = array<i64: 2, 8, 256>}, {pipeline_mode = #tpu.pipeline_mode<synchronous>, transform_indices = @transform_1, window_bounds = array<i64: 8, 2>}, {pipeline_mode = #tpu.pipeline_mode<synchronous>, transform_indices = @transform_2, window_bounds = array<i64: 1, 2>}, {pipeline_mode = #tpu.pipeline_mode<synchronous>, transform_indices = @transform_3, window_bounds = array<i64: 8, 2>}, {pipeline_mode = #tpu.pipeline_mode<synchronous>, transform_indices = @transform_4, window_bounds = array<i64: 8, 1>}, {transform_indices = @transform_5, window_bounds = array<i64: 2, 8, 256>}]} {
    %c0 = arith.constant 0 : index
    %c0_0 = arith.constant 0 : index
    %c0_1 = arith.constant 0 : index
    %0 = vector.load %arg1[%c0, %c0_0, %c0_1] : memref<2x8x256xf32, #tpu.memory_space<vmem>>, vector<2x8x256xf32>
    %cst = arith.constant dense<0.000000e+00> : vector<2x8xf32>
    %1 = vector.multi_reduction <add>, %0, %cst [2] : vector<2x8x256xf32> to vector<2x8xf32>
    %2 = vector.shape_cast %1 : vector<2x8xf32> to vector<2x8x1xf32>
    %cst_2 = arith.constant 3.906250e-03 : f32
    %3 = vector.broadcast %cst_2 : f32 to vector<2x8x1xf32>
    %4 = arith.mulf %2, %3 : vector<2x8x1xf32>
    %c0_3 = arith.constant 0 : index
    %c0_4 = arith.constant 0 : index
    %5 = vector.load %arg2[%c0_3, %c0_4] : memref<8x2xf32, #tpu.memory_space<vmem>>, vector<8x2xf32>
    %6 = vector.shape_cast %5 : vector<8x2xf32> to vector<1x8x2xf32>
    %7 = vector.broadcast %4 : vector<2x8x1xf32> to vector<2x8x2xf32>
    %8 = vector.broadcast %6 : vector<1x8x2xf32> to vector<2x8x2xf32>
    %9 = arith.mulf %7, %8 : vector<2x8x2xf32>
    %cst_5 = arith.constant dense<0.000000e+00> : vector<2x2xf32>
    %10 = vector.multi_reduction <add>, %9, %cst_5 [1] : vector<2x8x2xf32> to vector<2x2xf32>
    %11 = vector.shape_cast %10 : vector<2x2xf32> to vector<2x1x2xf32>
    %c0_6 = arith.constant 0 : index
    %c0_7 = arith.constant 0 : index
    %12 = vector.load %arg3[%c0_6, %c0_7] : memref<1x2xf32, #tpu.memory_space<vmem>>, vector<1x2xf32>
    %13 = vector.shape_cast %12 : vector<1x2xf32> to vector<1x1x2xf32>
    %14 = vector.broadcast %13 : vector<1x1x2xf32> to vector<2x1x2xf32>
    %15 = arith.addf %11, %14 : vector<2x1x2xf32>
    %cst_8 = arith.constant 0.000000e+00 : f32
    %16 = vector.broadcast %cst_8 : f32 to vector<2x1x2xf32>
    %17 = arith.maximumf %15, %16 : vector<2x1x2xf32>
    %c0_9 = arith.constant 0 : index
    %c0_10 = arith.constant 0 : index
    %18 = vector.load %arg4[%c0_9, %c0_10] : memref<8x2xf32, #tpu.memory_space<vmem>>, vector<8x2xf32>
    %19 = vector.shape_cast %18 : vector<8x2xf32> to vector<1x8x2xf32>
    %20 = vector.broadcast %17 : vector<2x1x2xf32> to vector<2x8x2xf32>
    %21 = vector.broadcast %19 : vector<1x8x2xf32> to vector<2x8x2xf32>
    %22 = arith.mulf %20, %21 : vector<2x8x2xf32>
    %cst_11 = arith.constant dense<0.000000e+00> : vector<2x8xf32>
    %23 = vector.multi_reduction <add>, %22, %cst_11 [2] : vector<2x8x2xf32> to vector<2x8xf32>
    %24 = vector.shape_cast %23 : vector<2x8xf32> to vector<2x8x1xf32>
    %c0_12 = arith.constant 0 : index
    %c0_13 = arith.constant 0 : index
    %25 = vector.load %arg5[%c0_12, %c0_13] : memref<8x1xf32, #tpu.memory_space<vmem>>, vector<8x1xf32>
    %26 = vector.shape_cast %25 : vector<8x1xf32> to vector<1x8x1xf32>
    %27 = vector.broadcast %26 : vector<1x8x1xf32> to vector<2x8x1xf32>
    %28 = arith.addf %24, %27 : vector<2x8x1xf32>
    %29 = arith.negf %28 : vector<2x8x1xf32>
    %30 = math.exp %29 : vector<2x8x1xf32>
    %cst_14 = arith.constant 1.000000e+00 : f32
    %31 = vector.broadcast %cst_14 : f32 to vector<2x8x1xf32>
    %32 = arith.addf %31, %30 : vector<2x8x1xf32>
    %33 = arith.divf %31, %32 : vector<2x8x1xf32>
    %34 = vector.broadcast %33 : vector<2x8x1xf32> to vector<2x8x256xf32>
    %35 = arith.mulf %0, %34 : vector<2x8x256xf32>
    %c0_15 = arith.constant 0 : index
    %c0_16 = arith.constant 0 : index
    %c0_17 = arith.constant 0 : index
    %36 = vector.load %arg6[%c0_15, %c0_16, %c0_17] : memref<2x8x256xf32, #tpu.memory_space<vmem>>, vector<2x8x256xf32>
    tpu.vector_store %arg6[%c0_15, %c0_16, %c0_17], %35 {strides = array<i32>} : memref<2x8x256xf32, #tpu.memory_space<vmem>>, vector<2x8x256xf32>,
    return
  }
  func.func @transform_0(%arg0: i32) -> (i32, i32, i32) {
    %c0_i32 = arith.constant 0 : i32
    %c0_i32_0 = arith.constant 0 : i32
    %c0_i32_1 = arith.constant 0 : i32
    return %arg0, %c0_i32, %c0_i32_0 : i32, i32, i32
  }
  func.func @transform_1(%arg0: i32) -> (i32, i32) {
    %c0_i32 = arith.constant 0 : i32
    %c0_i32_0 = arith.constant 0 : i32
    %c0_i32_1 = arith.constant 0 : i32
    return %c0_i32, %c0_i32_0 : i32, i32
  }
  func.func @transform_2(%arg0: i32) -> (i32, i32) {
    %c0_i32 = arith.constant 0 : i32
    %c0_i32_0 = arith.constant 0 : i32
    %c0_i32_1 = arith.constant 0 : i32
    return %c0_i32, %c0_i32_0 : i32, i32
  }
  func.func @transform_3(%arg0: i32) -> (i32, i32) {
    %c0_i32 = arith.constant 0 : i32
    %c0_i32_0 = arith.constant 0 : i32
    %c0_i32_1 = arith.constant 0 : i32
    return %c0_i32, %c0_i32_0 : i32, i32
  }
  func.func @transform_4(%arg0: i32) -> (i32, i32) {
    %c0_i32 = arith.constant 0 : i32
    %c0_i32_0 = arith.constant 0 : i32
    %c0_i32_1 = arith.constant 0 : i32
    return %c0_i32, %c0_i32_0 : i32, i32
  }
  func.func @transform_5(%arg0: i32) -> (i32, i32, i32) {
    %c0_i32 = arith.constant 0 : i32
    %c0_i32_0 = arith.constant 0 : i32
    %c0_i32_1 = arith.constant 0 : i32
    return %arg0, %c0_i32, %c0_i32_0 : i32, i32, i32
  }
}

</mosaic_0001>

<llo_original>
// kernel: _se_block_impl.1
$region0: #{_se_block_impl.1}
  #allocation0 [shape = 'u32[]', space=smem, size = 0x4, offset = 0x4, fixed_abs, tag = 'smem constant byte address 0x4 - core index']
  #allocation1 [shape = 'u32[144,128]{1,0:T(1,128)}', space=vmem, size = 0x12000, scoped, tag = 'internal scratch']
  %s0 = inlined_call_operand.vmem [shape: f32[2,8,256], index: 0, kind: input, shape index: {}, may-alias: {0,5}]
  %s1 = inlined_call_operand.vmem [shape: f32[8,2], index: 1, kind: input, shape index: {}]
  %s2 = inlined_call_operand.vmem [shape: f32[1,2], index: 2, kind: input, shape index: {}]
  %s3 = inlined_call_operand.vmem [shape: f32[8,2], index: 3, kind: input, shape index: {}]
  %s4 = inlined_call_operand.vmem [shape: f32[8,1], index: 4, kind: input, shape index: {}]
  %s5 = inlined_call_operand.vmem [shape: f32[2,8,256], index: 5, kind: output, shape index: {}, may-alias: {0,5}]
  %s6 = sld [smem:[#allocation0]]
  $region30: #{_se_block_impl.1} parent=0
    _
  %s8 = ssub.s32 1, %s6
  %s9 = scalar_select 0, %s8, %s6
  // Predicated region
  $region2: #{_se_block_impl.1} parent=0 // pred_check
    _
  $region3: #{_se_block_impl.1} parent=0 // pred_check_branch
    %11 = sbr.rel (0) target = $region5
  $region4: #{_se_block_impl.1} parent=0 // pred_region
    _
  $region5: #{_se_block_impl.1} parent=0 // pred_fallthru
    _
  // Predicated region
  $region6: #{_se_block_impl.1} parent=0 // pred_check
    _
  $region7: #{_se_block_impl.1} parent=0 // pred_check_branch
    %13 = sbr.rel (0) target = $region9
  $region8: #{_se_block_impl.1} parent=0 // pred_region
    _
  $region9: #{_se_block_impl.1} parent=0 // pred_fallthru
    _
  // Predicated region
  $region10: #{_se_block_impl.1} parent=0 // pred_check
    _
  $region11: #{_se_block_impl.1} parent=0 // pred_check_branch
    %15 = sbr.rel (0) target = $region13
  $region12: #{_se_block_impl.1} parent=0 // pred_region
    _
  $region13: #{_se_block_impl.1} parent=0 // pred_fallthru
    _
  // Predicated region
  $region14: #{_se_block_impl.1} parent=0 // pred_check
    _
  $region15: #{_se_block_impl.1} parent=0 // pred_check_branch
    %17 = sbr.rel (0) target = $region17
  $region16: #{_se_block_impl.1} parent=0 // pred_region
    _
  $region17: #{_se_block_impl.1} parent=0 // pred_fallthru
    _
  // Predicated region
  $region18: #{_se_block_impl.1} parent=0 // pred_check
    _
  $region19: #{_se_block_impl.1} parent=0 // pred_check_branch
    %19 = sbr.rel (0) target = $region21
  $region20: #{_se_block_impl.1} parent=0 // pred_region
    _
  $region21: #{_se_block_impl.1} parent=0 // pred_fallthru
    _
  %v20 = vld [vmem:[%s0] sm:$0xff]
  %v21 = vld [vmem:[%s0 + $0x8] sm:$0xff]
  %v22 = vld [vmem:[%s0 + $0x10] sm:$0xff]
  %v23 = vld [vmem:[%s0 + $0x18] sm:$0xff]
  %v24 = vadd.f32 %v20, %v21
  %25 = vadd.xlane.f32.xlu0 %v24
  %v26 = vpop.xlane.xlu0 %25
  %v27 = vadd.f32 %v22, %v23
  %28 = vadd.xlane.f32.xlu0 %v27
  %v29 = vpop.xlane.xlu0 %28
  %v30 = vmul.f32 %v26, 0.00390625
  %v31 = vmul.f32 %v29, 0.00390625
  %v32 = vld [vmem:[%s1] sm:$0xff]
  %v33 = vmul.f32 %v30, %v32
  %v34 = vmul.f32 %v31, %v32
  %vm35 = vcmask 15360
  %v36 = vsel %vm35, %v33, 0.0
  %v37 = vrot.slane %v36, 4
  %v38 = vadd.f32 %v36, %v37
  %v39 = vrot.slane %v38, 2
  %v40 = vadd.f32 %v38, %v39
  %v41 = vrot.slane %v40, 1
  %v42 = vadd.f32 %v40, %v41
  %v43 = vsel %vm35, %v34, 0.0
  %v44 = vrot.slane %v43, 4
  %v45 = vadd.f32 %v43, %v44
  %v46 = vrot.slane %v45, 2
  %v47 = vadd.f32 %v45, %v46
  %v48 = vrot.slane %v47, 1
  %v49 = vadd.f32 %v47, %v48
  %v50 = vld [vmem:[%s2] sm:$0x1]
  %v51 = vadd.f32 %v42, %v50
  %v52 = vadd.f32 %v49, %v50
  %v53 = vmax.f32 %v51, 0.0
  %v54 = vmax.f32 %v52, 0.0
  %v55 = vld [vmem:[%s3] sm:$0xff]
  %v56 = vlaneseq
  %v57 = vshrl.u32 %v56, 7
  %v58 = vsub.s32 0, %v57
  %v59 = vrot.slane %v53, %v58
  %v60 = vlaneseq
  %v61 = vshrl.u32 %v60, 7
  %v62 = vsub.s32 0, %v61
  %v63 = vrot.slane %v54, %v62
  %v64 = vmul.f32 %v59, %v55
  %v65 = vmul.f32 %v63, %v55
  %v66 = vsel %vm35, %v64, 0.0
  %67 = vadd.xlane.f32.xlu0 %v66
  %v68 = vpop.xlane.xlu0 %67
  %v69 = vsel %vm35, %v65, 0.0
  %70 = vadd.xlane.f32.xlu0 %v69
  %v71 = vpop.xlane.xlu0 %70
  %v72 = vld [vmem:[%s4] sm:$0xff]
  %v73 = vadd.f32 %v68, %v72
  %v74 = vadd.f32 %v71, %v72
  %v75 = vxor.u32 %v73, 2147483648
  %v76 = vxor.u32 %v74, 2147483648
  %v77 = vmul.f32 %v75, 1.442695
  %v78 = vpow.pop %v77
  %v79 = vmul.f32 %v76, 1.442695
  %v80 = vpow.pop %v79
  %v81 = vadd.f32 %v78, 1.0
  %v82 = vadd.f32 %v80, 1.0
  %v83 = vrcp.pop %v81
  %v84 = vmul.f32 1.0, %v83
  %v85 = vrcp.pop %v82
  %v86 = vmul.f32 1.0, %v85
  %88 = vset.pattern.permute.xlu0 0
  %89 = vperm.xlu0 %88, %v84
  %v90 = vpop.permute.xlu0 %89
  %93 = vset.pattern.permute.xlu0 0
  %94 = vperm.xlu0 %93, %v86
  %v95 = vpop.permute.xlu0 %94
  %v97 = vmul.f32 %v20, %v90
  %v98 = vmul.f32 %v21, %v90
  %v99 = vmul.f32 %v22, %v95
  %v100 = vmul.f32 %v23, %v95
  %101 = vst [vmem:[%s5] sm:$0xff] %v97
  %102 = vst [vmem:[%s5 + $0x8] sm:$0xff] %v98
  %103 = vst [vmem:[%s5 + $0x10] sm:$0xff] %v99
  %104 = vst [vmem:[%s5 + $0x18] sm:$0xff] %v100
  // Predicated region
  $region22: #{_se_block_impl.1} parent=0 // pred_check
    _
  $region23: #{_se_block_impl.1} parent=0 // pred_check_branch
    %106 = sbr.rel (0) target = $region25
  $region24: #{_se_block_impl.1} parent=0 // pred_region
    _
  $region25: #{_se_block_impl.1} parent=0 // pred_fallthru
    _
  // Predicated region
  $region26: #{_se_block_impl.1} parent=0 // pred_check
    _
  $region27: #{_se_block_impl.1} parent=0 // pred_check_branch
    %108 = sbr.rel (0) target = $region29
  $region28: #{_se_block_impl.1} parent=0 // pred_region
    _
  $region29: #{_se_block_impl.1} parent=0 // pred_fallthru
    _

</llo_original>
